<compile_context>
chip_gen: v5e
topology: v5e:2x2
jax: 0.10.0
libtpu: 0.0.40
codegen_flags: <defaults>
</compile_context>

<pallas_src>
import numpy as np
import jax
import jax.numpy as jnp
from jax.experimental import pallas as pl
from jax.experimental.pallas import tpu as pltpu

_VALID_REDUCTIONS = ("s", "m", "n", "mc", "mb", "mbc", "sb", "sc", "sbc")

_VMEM_LIMIT_BYTES = 40 * 1024 * 1024    # explicit scoped-VMEM limit (v7x-safe)
_TILE_VMEM_BUDGET = 20 * 1024 * 1024    # target for the double-buffered per-step working set


def _pick_spatial_tile(C, in_bytes, out_bytes, n_rows):
    """Pick T_S = spatial rows (of 128 lanes) per tile; multiple of 8."""
    # per spatial element: logits in + 2 map outputs (x2 double buffers),
    # + gt int32 (x2), + ~3 f32 compute slabs (max / sum / scale).
    per_elem = 2 * (C * (in_bytes + 2 * out_bytes) + 4) + 12
    t_s = (_TILE_VMEM_BUDGET // per_elem) // 128
    t_s = max(8, min(512, (t_s // 8) * 8))
    # don't pad tiny inputs up to a huge tile
    t_s = min(t_s, ((n_rows + 7) // 8) * 8)
    return int(t_s)


def _base_loss_kernel(w_ref, logits_ref, gt_ref, gt_hot_ref, probas_ref, red_ref):
    """One (batch b, spatial tile t) grid step.

    Blocks are (1, C, T_S, 128): the class axis is leading/non-tiled, the
    spatial axis is (sublanes, lanes)-dense, so every per-class slab fills
    (8,128) vregs and the softmax reduction over C is an unrolled elementwise
    loop (VPU/EUP only).
    """
    t = pl.program_id(1)
    C = logits_ref.shape[1]
    out_dtype = probas_ref.dtype

    # Resident accumulator: same output block for every t of a batch row;
    # zero it on the first spatial tile, HBM writeback happens once per b.
    @pl.when(t == 0)
    def _():
        red_ref[...] = jnp.zeros_like(red_ref)

    gt = gt_ref[0, 0]                                    # (T_S, 128) int32
    valid = (gt >= 0).astype(jnp.float32)                # positive_filter mask

    # ---- softmax over the class axis (filter_and_2probas, use_softmax=True) ----
    m = logits_ref[0, 0].astype(jnp.float32)
    for c in range(1, C):
        m = jnp.maximum(m, logits_ref[0, c].astype(jnp.float32))
    s = jnp.exp(logits_ref[0, 0].astype(jnp.float32) - m)
    for c in range(1, C):
        s = s + jnp.exp(logits_ref[0, c].astype(jnp.float32) - m)

    # EUP reciprocal instead of a per-element divide; one Newton step keeps
    # ~f32 accuracy while the rcp itself stays on the (otherwise idle) EUP.
    r = pl.reciprocal(s, approx=True)
    r = r * (2.0 - s * r)
    scale = r * valid                                    # fold the gt>=0 mask in

    for c in range(C):
        # exp is recomputed per class (EUP is cheap vs. HBM; avoids keeping
        # C f32 slabs live / spilled).
        e = jnp.exp(logits_ref[0, c].astype(jnp.float32) - m)
        pw = e * scale * w_ref[c]                        # apply_weights: scalar from SMEM
        probas_ref[0, c] = pw.astype(out_dtype)
        gt_hot_ref[0, c] = (gt == c).astype(gt_hot_ref.dtype)
        # spatial partial sum, kept vreg-shaped (8,128): the leading-axis
        # reduce lowers to elementwise VPU adds (no XLU per tile).
        red_ref[0, c] += pw.reshape(-1, 8, 128).sum(axis=0)


def base_loss_forward(gt, logits, weights=None, reduction="mc"):
    """JAX/Pallas port of the _BaseLoss pipeline.

    gt:      int array [B, H, W]  (values in [-1, C-1]; negative ids ignored)
    logits:  float array [B, C, H, W] (any float dtype; kept native, math in f32)
    weights: per-class weights (the [1, C, 1, 1] buffer), or None
    reduction: one of ('s','m','n','mc','mb','mbc','sb','sc','sbc')

    Returns (gt_hot [B,C,H,W], weighted_probas [B,C,H,W], reduced).
    """
    assert reduction in _VALID_REDUCTIONS, f"{reduction} is wrong reducef mode"
    B, C, H, W = logits.shape
    HW = H * W
    dtype = logits.dtype
    in_bytes = jnp.dtype(dtype).itemsize
    out_bytes = in_bytes                      # maps are emitted in the logits dtype

    n_rows = pl.cdiv(HW, 128)                 # spatial rows of 128 lanes
    T_S = _pick_spatial_tile(C, in_bytes, out_bytes, n_rows)
    n_rows_pad = ((n_rows + T_S - 1) // T_S) * T_S
    HW_pad = n_rows_pad * 128
    nT = n_rows_pad // T_S

    logits3 = logits.reshape(B, C, HW)        # native dtype, no f32 upcast
    gt2 = gt.reshape(B, HW).astype(jnp.int32)
    if HW_pad != HW:
        pad = HW_pad - HW
        logits3 = jnp.pad(logits3, ((0, 0), (0, 0), (0, pad)))
        gt2 = jnp.pad(gt2, ((0, 0), (0, pad)), constant_values=-1)  # masked out
    logits4 = logits3.reshape(B, C, n_rows_pad, 128)
    gt4 = gt2.reshape(B, 1, n_rows_pad, 128)

    if weights is None:
        w1 = jnp.ones((C,), jnp.float32)
    else:
        w1 = jnp.asarray(weights, jnp.float32).reshape(-1)
    assert w1.shape == (C,)

    gt_hot4, probas4, red4 = pl.pallas_call(
        _base_loss_kernel,
        grid=(B, nT),
        in_specs=[
            pl.BlockSpec(memory_space=pltpu.MemorySpace.SMEM),           # weights (C,)
            pl.BlockSpec((1, C, T_S, 128), lambda b, t: (b, 0, t, 0)),   # logits
            pl.BlockSpec((1, 1, T_S, 128), lambda b, t: (b, 0, t, 0)),   # gt
        ],
        out_specs=[
            pl.BlockSpec((1, C, T_S, 128), lambda b, t: (b, 0, t, 0)),   # gt_hot
            pl.BlockSpec((1, C, T_S, 128), lambda b, t: (b, 0, t, 0)),   # probas_w
            pl.BlockSpec((1, C, 8, 128), lambda b, t: (b, 0, 0, 0)),     # resident spatial sums
        ],
        out_shape=(
            jax.ShapeDtypeStruct((B, C, n_rows_pad, 128), dtype),
            jax.ShapeDtypeStruct((B, C, n_rows_pad, 128), dtype),
            jax.ShapeDtypeStruct((B, C, 8, 128), jnp.float32),
        ),
        compiler_params=pltpu.CompilerParams(
            dimension_semantics=("parallel", "arbitrary"),
            vmem_limit_bytes=_VMEM_LIMIT_BYTES,
        ),
    )(w1, logits4, gt4)

    gt_hot = gt_hot4.reshape(B, C, HW_pad)[:, :, :HW].reshape(B, C, H, W)
    probas_w = probas4.reshape(B, C, HW_pad)[:, :, :HW].reshape(B, C, H, W)
    red_bc = red4.sum(axis=(2, 3))            # (B, C) f32 spatial sums (padding adds 0)

    # ---- finish create_reduction() semantics (workdims = 'bcwh') ----
    if reduction == "n":
        reduced = probas_w
    else:
        keep = reduction[1:]
        out = red_bc
        denom = float(HW)
        if "c" not in keep:
            out = out.sum(axis=-1)
            denom *= C
        if "b" not in keep:
            out = out.sum(axis=0)
            denom *= B
        reduced = out / denom if reduction[0] == "m" else out
    return gt_hot, probas_w, reduced


# ---------------- pure-JAX reference (mirrors the PyTorch code) ----------------
def _ref_forward(gt, logits, weights, reduction):
    B, C, H, W = logits.shape
    probas = jax.nn.softmax(logits.astype(jnp.float32), axis=1)
    hot_full = jax.nn.one_hot(gt + 1, C + 1, dtype=jnp.float32)      # (B,H,W,C+1)
    hot_full = jnp.transpose(hot_full, (0, 3, 1, 2))                  # (B,C+1,H,W)
    probas = probas * (1.0 - hot_full[:, 0:1])
    gt_hot = hot_full[:, 1:]
    probas_w = probas * jnp.asarray(weights, jnp.float32).reshape(1, C, 1, 1)
    if reduction == "n":
        reduced = probas_w
    else:
        dims = tuple(i for i, ch in enumerate("bcwh") if ch not in reduction)
        reduced = probas_w.mean(dims) if reduction[0] == "m" else probas_w.sum(dims)
    return gt_hot, probas_w, reduced


if __name__ == "__main__":
    B, C, H, W = 2, 4, 16, 16
    key = jax.random.PRNGKey(0)
    k1, k2 = jax.random.split(key)
    logits = jax.random.normal(k1, (B, C, H, W), dtype=jnp.float32)
    gt = jax.random.randint(k2, (B, H, W), minval=-1, maxval=C, dtype=jnp.int32)
    weights = jnp.array([0.5, 1.0, 1.5, 2.0], dtype=jnp.float32)

    ok = True
    # f32 path
    for reduction in ("mc", "sbc", "s", "n", "mbc", "sc"):
        gt_hot, probas_w, reduced = base_loss_forward(gt, logits, weights, reduction)
        jax.block_until_ready(reduced)
        r_hot, r_pw, r_red = _ref_forward(gt, logits, weights, reduction)
        ok &= bool(np.allclose(np.asarray(gt_hot), np.asarray(r_hot), atol=1e-6))
        ok &= bool(np.allclose(np.asarray(probas_w), np.asarray(r_pw), atol=1e-4, rtol=1e-4))
        ok &= bool(np.allclose(np.asarray(reduced), np.asarray(r_red), atol=1e-4, rtol=1e-4))

    # bf16 end-to-end path (native-dtype I/O; reduction still accumulated in f32)
    logits_bf = logits.astype(jnp.bfloat16)
    gt_hot_b, probas_w_b, reduced_b = base_loss_forward(gt, logits_bf, weights, "mc")
    jax.block_until_ready(reduced_b)
    r_hot_b, r_pw_b, r_red_b = _ref_forward(gt, logits_bf, weights, "mc")
    ok &= (probas_w_b.dtype == jnp.bfloat16) and (gt_hot_b.dtype == jnp.bfloat16)
    ok &= bool(np.allclose(np.asarray(gt_hot_b.astype(jnp.float32)),
                           np.asarray(r_hot_b), atol=1e-6))
    ok &= bool(np.allclose(np.asarray(probas_w_b.astype(jnp.float32)),
                           np.asarray(r_pw_b), atol=2e-2, rtol=2e-2))
    ok &= bool(np.allclose(np.asarray(reduced_b), np.asarray(r_red_b), atol=1e-3, rtol=1e-3))

    print("KERNEL_OK" if ok else "MISMATCH")
</pallas_src>

<mosaic_0001>
module attributes {stable_mosaic.version = 11 : i64} {
  func.func @_base_loss_kernel(%arg0: i32, %arg1: i32, %arg2: memref<4xf32, #tpu.memory_space<smem>>, %arg3: memref<1x4x8x128xf32, #tpu.memory_space<vmem>>, %arg4: memref<1x1x8x128xi32, #tpu.memory_space<vmem>>, %arg5: memref<1x4x8x128xf32, #tpu.memory_space<vmem>>, %arg6: memref<1x4x8x128xf32, #tpu.memory_space<vmem>>, %arg7: memref<1x4x8x128xf32, #tpu.memory_space<vmem>>) attributes {dimension_semantics = [#tpu.dimension_semantics<parallel>, #tpu.dimension_semantics<arbitrary>], iteration_bounds = array<i64: 2, 1>, scalar_prefetch = 0 : i64, scratch_operands = 0 : i64, tpu.core_type = #tpu.core_type<tc>, window_params = [{transform_indices = @transform_0, window_bounds = array<i64: 4>}, {transform_indices = @transform_1, window_bounds = array<i64: 1, 4, 8, 128>}, {transform_indices = @transform_2, window_bounds = array<i64: 1, 1, 8, 128>}, {transform_indices = @transform_3, window_bounds = array<i64: 1, 4, 8, 128>}, {transform_indices = @transform_4, window_bounds = array<i64: 1, 4, 8, 128>}, {transform_indices = @transform_5, window_bounds = array<i64: 1, 4, 8, 128>}]} {
    %c0_i32 = arith.constant 0 : i32
    %0 = arith.cmpi eq, %arg1, %c0_i32 : i32
    %1 = arith.extui %0 : i1 to i32
    %c0_i32_0 = arith.constant 0 : i32
    %2 = arith.cmpi ne, %1, %c0_i32_0 : i32
    scf.if %2 {
      %cst_123 = arith.constant 0.000000e+00 : f32
      %149 = vector.broadcast %cst_123 : f32 to vector<1x4x8x128xf32>
      %c0_124 = arith.constant 0 : index
      %c0_125 = arith.constant 0 : index
      %c0_126 = arith.constant 0 : index
      %c0_127 = arith.constant 0 : index
      %150 = vector.load %arg7[%c0_124, %c0_125, %c0_126, %c0_127] : memref<1x4x8x128xf32, #tpu.memory_space<vmem>>, vector<1x4x8x128xf32>
      tpu.vector_store %arg7[%c0_124, %c0_125, %c0_126, %c0_127], %149 {strides = array<i32>} : memref<1x4x8x128xf32, #tpu.memory_space<vmem>>, vector<1x4x8x128xf32>,
    } else {
    }
    %c0 = arith.constant 0 : index
    %c0_1 = arith.constant 0 : index
    %c0_2 = arith.constant 0 : index
    %c0_3 = arith.constant 0 : index
    %3 = vector.load %arg4[%c0, %c0_1, %c0_2, %c0_3] : memref<1x1x8x128xi32, #tpu.memory_space<vmem>>, vector<1x1x8x128xi32>
    %4 = vector.shape_cast %3 : vector<1x1x8x128xi32> to vector<8x128xi32>
    %c0_i32_4 = arith.constant 0 : i32
    %5 = vector.broadcast %c0_i32_4 : i32 to vector<8x128xi32>
    %6 = arith.cmpi sge, %4, %5 : vector<8x128xi32>
    %7 = arith.extui %6 : vector<8x128xi1> to vector<8x128xi32>
    %8 = arith.sitofp %7 : vector<8x128xi32> to vector<8x128xf32>
    %c0_5 = arith.constant 0 : index
    %c0_6 = arith.constant 0 : index
    %c0_7 = arith.constant 0 : index
    %c0_8 = arith.constant 0 : index
    %9 = vector.load %arg3[%c0_5, %c0_6, %c0_7, %c0_8] : memref<1x4x8x128xf32, #tpu.memory_space<vmem>>, vector<1x1x8x128xf32>
    %10 = vector.shape_cast %9 : vector<1x1x8x128xf32> to vector<8x128xf32>
    %c0_9 = arith.constant 0 : index
    %c1 = arith.constant 1 : index
    %c0_10 = arith.constant 0 : index
    %c0_11 = arith.constant 0 : index
    %11 = vector.load %arg3[%c0_9, %c1, %c0_10, %c0_11] : memref<1x4x8x128xf32, #tpu.memory_space<vmem>>, vector<1x1x8x128xf32>
    %12 = vector.shape_cast %11 : vector<1x1x8x128xf32> to vector<8x128xf32>
    %13 = arith.maximumf %10, %12 : vector<8x128xf32>
    %c0_12 = arith.constant 0 : index
    %c2 = arith.constant 2 : index
    %c0_13 = arith.constant 0 : index
    %c0_14 = arith.constant 0 : index
    %14 = vector.load %arg3[%c0_12, %c2, %c0_13, %c0_14] : memref<1x4x8x128xf32, #tpu.memory_space<vmem>>, vector<1x1x8x128xf32>
    %15 = vector.shape_cast %14 : vector<1x1x8x128xf32> to vector<8x128xf32>
    %16 = arith.maximumf %13, %15 : vector<8x128xf32>
    %c0_15 = arith.constant 0 : index
    %c3 = arith.constant 3 : index
    %c0_16 = arith.constant 0 : index
    %c0_17 = arith.constant 0 : index
    %17 = vector.load %arg3[%c0_15, %c3, %c0_16, %c0_17] : memref<1x4x8x128xf32, #tpu.memory_space<vmem>>, vector<1x1x8x128xf32>
    %18 = vector.shape_cast %17 : vector<1x1x8x128xf32> to vector<8x128xf32>
    %19 = arith.maximumf %16, %18 : vector<8x128xf32>
    %c0_18 = arith.constant 0 : index
    %c0_19 = arith.constant 0 : index
    %c0_20 = arith.constant 0 : index
    %c0_21 = arith.constant 0 : index
    %20 = vector.load %arg3[%c0_18, %c0_19, %c0_20, %c0_21] : memref<1x4x8x128xf32, #tpu.memory_space<vmem>>, vector<1x1x8x128xf32>
    %21 = vector.shape_cast %20 : vector<1x1x8x128xf32> to vector<8x128xf32>
    %22 = arith.subf %21, %19 : vector<8x128xf32>
    %23 = math.exp %22 : vector<8x128xf32>
    %c0_22 = arith.constant 0 : index
    %c1_23 = arith.constant 1 : index
    %c0_24 = arith.constant 0 : index
    %c0_25 = arith.constant 0 : index
    %24 = vector.load %arg3[%c0_22, %c1_23, %c0_24, %c0_25] : memref<1x4x8x128xf32, #tpu.memory_space<vmem>>, vector<1x1x8x128xf32>
    %25 = vector.shape_cast %24 : vector<1x1x8x128xf32> to vector<8x128xf32>
    %26 = arith.subf %25, %19 : vector<8x128xf32>
    %27 = math.exp %26 : vector<8x128xf32>
    %28 = arith.addf %23, %27 : vector<8x128xf32>
    %c0_26 = arith.constant 0 : index
    %c2_27 = arith.constant 2 : index
    %c0_28 = arith.constant 0 : index
    %c0_29 = arith.constant 0 : index
    %29 = vector.load %arg3[%c0_26, %c2_27, %c0_28, %c0_29] : memref<1x4x8x128xf32, #tpu.memory_space<vmem>>, vector<1x1x8x128xf32>
    %30 = vector.shape_cast %29 : vector<1x1x8x128xf32> to vector<8x128xf32>
    %31 = arith.subf %30, %19 : vector<8x128xf32>
    %32 = math.exp %31 : vector<8x128xf32>
    %33 = arith.addf %28, %32 : vector<8x128xf32>
    %c0_30 = arith.constant 0 : index
    %c3_31 = arith.constant 3 : index
    %c0_32 = arith.constant 0 : index
    %c0_33 = arith.constant 0 : index
    %34 = vector.load %arg3[%c0_30, %c3_31, %c0_32, %c0_33] : memref<1x4x8x128xf32, #tpu.memory_space<vmem>>, vector<1x1x8x128xf32>
    %35 = vector.shape_cast %34 : vector<1x1x8x128xf32> to vector<8x128xf32>
    %36 = arith.subf %35, %19 : vector<8x128xf32>
    %37 = math.exp %36 : vector<8x128xf32>
    %38 = arith.addf %33, %37 : vector<8x128xf32>
    %39 = tpu.reciprocal %38 {approx = true} : vector<8x128xf32> -> vector<8x128xf32>
    %40 = arith.mulf %38, %39 : vector<8x128xf32>
    %cst = arith.constant 2.000000e+00 : f32
    %41 = vector.broadcast %cst : f32 to vector<8x128xf32>
    %42 = arith.subf %41, %40 : vector<8x128xf32>
    %43 = arith.mulf %39, %42 : vector<8x128xf32>
    %44 = arith.mulf %43, %8 : vector<8x128xf32>
    %c0_34 = arith.constant 0 : index
    %c0_35 = arith.constant 0 : index
    %c0_36 = arith.constant 0 : index
    %c0_37 = arith.constant 0 : index
    %45 = vector.load %arg3[%c0_34, %c0_35, %c0_36, %c0_37] : memref<1x4x8x128xf32, #tpu.memory_space<vmem>>, vector<1x1x8x128xf32>
    %46 = vector.shape_cast %45 : vector<1x1x8x128xf32> to vector<8x128xf32>
    %47 = arith.subf %46, %19 : vector<8x128xf32>
    %48 = math.exp %47 : vector<8x128xf32>
    %49 = arith.mulf %48, %44 : vector<8x128xf32>
    %c0_38 = arith.constant 0 : index
    %50 = memref.load %arg2[%c0_38] : memref<4xf32, #tpu.memory_space<smem>>
    %51 = vector.broadcast %50 : f32 to vector<8x128xf32>
    %52 = arith.mulf %49, %51 : vector<8x128xf32>
    %c0_39 = arith.constant 0 : index
    %c0_40 = arith.constant 0 : index
    %c0_41 = arith.constant 0 : index
    %c0_42 = arith.constant 0 : index
    %53 = vector.load %arg6[%c0_39, %c0_40, %c0_41, %c0_42] : memref<1x4x8x128xf32, #tpu.memory_space<vmem>>, vector<1x1x8x128xf32>
    %54 = vector.shape_cast %53 : vector<1x1x8x128xf32> to vector<8x128xf32>
    %55 = vector.shape_cast %52 : vector<8x128xf32> to vector<1x1x8x128xf32>
    tpu.vector_store %arg6[%c0_39, %c0_40, %c0_41, %c0_42], %55 {strides = array<i32>} : memref<1x4x8x128xf32, #tpu.memory_space<vmem>>, vector<1x1x8x128xf32>,
    %c0_i32_43 = arith.constant 0 : i32
    %56 = vector.broadcast %c0_i32_43 : i32 to vector<8x128xi32>
    %57 = arith.cmpi eq, %4, %56 : vector<8x128xi32>
    %58 = arith.extui %57 : vector<8x128xi1> to vector<8x128xi32>
    %59 = arith.sitofp %58 : vector<8x128xi32> to vector<8x128xf32>
    %c0_44 = arith.constant 0 : index
    %c0_45 = arith.constant 0 : index
    %c0_46 = arith.constant 0 : index
    %c0_47 = arith.constant 0 : index
    %60 = vector.load %arg5[%c0_44, %c0_45, %c0_46, %c0_47] : memref<1x4x8x128xf32, #tpu.memory_space<vmem>>, vector<1x1x8x128xf32>
    %61 = vector.shape_cast %60 : vector<1x1x8x128xf32> to vector<8x128xf32>
    %62 = vector.shape_cast %59 : vector<8x128xf32> to vector<1x1x8x128xf32>
    tpu.vector_store %arg5[%c0_44, %c0_45, %c0_46, %c0_47], %62 {strides = array<i32>} : memref<1x4x8x128xf32, #tpu.memory_space<vmem>>, vector<1x1x8x128xf32>,
    %c0_48 = arith.constant 0 : index
    %c0_49 = arith.constant 0 : index
    %c0_50 = arith.constant 0 : index
    %c0_51 = arith.constant 0 : index
    %63 = vector.load %arg7[%c0_48, %c0_49, %c0_50, %c0_51] : memref<1x4x8x128xf32, #tpu.memory_space<vmem>>, vector<1x1x8x128xf32>
    %64 = vector.shape_cast %63 : vector<1x1x8x128xf32> to vector<8x128xf32>
    %65 = vector.shape_cast %52 : vector<8x128xf32> to vector<1x8x128xf32>
    %cst_52 = arith.constant dense<0.000000e+00> : vector<8x128xf32>
    %66 = vector.multi_reduction <add>, %65, %cst_52 [0] : vector<1x8x128xf32> to vector<8x128xf32>
    %67 = arith.addf %64, %66 : vector<8x128xf32>
    %c0_53 = arith.constant 0 : index
    %c0_54 = arith.constant 0 : index
    %c0_55 = arith.constant 0 : index
    %c0_56 = arith.constant 0 : index
    %68 = vector.load %arg7[%c0_53, %c0_54, %c0_55, %c0_56] : memref<1x4x8x128xf32, #tpu.memory_space<vmem>>, vector<1x1x8x128xf32>
    %69 = vector.shape_cast %68 : vector<1x1x8x128xf32> to vector<8x128xf32>
    %70 = vector.shape_cast %67 : vector<8x128xf32> to vector<1x1x8x128xf32>
    tpu.vector_store %arg7[%c0_53, %c0_54, %c0_55, %c0_56], %70 {strides = array<i32>} : memref<1x4x8x128xf32, #tpu.memory_space<vmem>>, vector<1x1x8x128xf32>,
    %c0_57 = arith.constant 0 : index
    %c1_58 = arith.constant 1 : index
    %c0_59 = arith.constant 0 : index
    %c0_60 = arith.constant 0 : index
    %71 = vector.load %arg3[%c0_57, %c1_58, %c0_59, %c0_60] : memref<1x4x8x128xf32, #tpu.memory_space<vmem>>, vector<1x1x8x128xf32>
    %72 = vector.shape_cast %71 : vector<1x1x8x128xf32> to vector<8x128xf32>
    %73 = arith.subf %72, %19 : vector<8x128xf32>
    %74 = math.exp %73 : vector<8x128xf32>
    %75 = arith.mulf %74, %44 : vector<8x128xf32>
    %c1_61 = arith.constant 1 : index
    %76 = memref.load %arg2[%c1_61] : memref<4xf32, #tpu.memory_space<smem>>
    %77 = vector.broadcast %76 : f32 to vector<8x128xf32>
    %78 = arith.mulf %75, %77 : vector<8x128xf32>
    %c0_62 = arith.constant 0 : index
    %c1_63 = arith.constant 1 : index
    %c0_64 = arith.constant 0 : index
    %c0_65 = arith.constant 0 : index
    %79 = vector.load %arg6[%c0_62, %c1_63, %c0_64, %c0_65] : memref<1x4x8x128xf32, #tpu.memory_space<vmem>>, vector<1x1x8x128xf32>
    %80 = vector.shape_cast %79 : vector<1x1x8x128xf32> to vector<8x128xf32>
    %81 = vector.shape_cast %78 : vector<8x128xf32> to vector<1x1x8x128xf32>
    tpu.vector_store %arg6[%c0_62, %c1_63, %c0_64, %c0_65], %81 {strides = array<i32>} : memref<1x4x8x128xf32, #tpu.memory_space<vmem>>, vector<1x1x8x128xf32>,
    %c1_i32 = arith.constant 1 : i32
    %82 = vector.broadcast %c1_i32 : i32 to vector<8x128xi32>
    %83 = arith.cmpi eq, %4, %82 : vector<8x128xi32>
    %84 = arith.extui %83 : vector<8x128xi1> to vector<8x128xi32>
    %85 = arith.sitofp %84 : vector<8x128xi32> to vector<8x128xf32>
    %c0_66 = arith.constant 0 : index
    %c1_67 = arith.constant 1 : index
    %c0_68 = arith.constant 0 : index
    %c0_69 = arith.constant 0 : index
    %86 = vector.load %arg5[%c0_66, %c1_67, %c0_68, %c0_69] : memref<1x4x8x128xf32, #tpu.memory_space<vmem>>, vector<1x1x8x128xf32>
    %87 = vector.shape_cast %86 : vector<1x1x8x128xf32> to vector<8x128xf32>
    %88 = vector.shape_cast %85 : vector<8x128xf32> to vector<1x1x8x128xf32>
    tpu.vector_store %arg5[%c0_66, %c1_67, %c0_68, %c0_69], %88 {strides = array<i32>} : memref<1x4x8x128xf32, #tpu.memory_space<vmem>>, vector<1x1x8x128xf32>,
    %c0_70 = arith.constant 0 : index
    %c1_71 = arith.constant 1 : index
    %c0_72 = arith.constant 0 : index
    %c0_73 = arith.constant 0 : index
    %89 = vector.load %arg7[%c0_70, %c1_71, %c0_72, %c0_73] : memref<1x4x8x128xf32, #tpu.memory_space<vmem>>, vector<1x1x8x128xf32>
    %90 = vector.shape_cast %89 : vector<1x1x8x128xf32> to vector<8x128xf32>
    %91 = vector.shape_cast %78 : vector<8x128xf32> to vector<1x8x128xf32>
    %cst_74 = arith.constant dense<0.000000e+00> : vector<8x128xf32>
    %92 = vector.multi_reduction <add>, %91, %cst_74 [0] : vector<1x8x128xf32> to vector<8x128xf32>
    %93 = arith.addf %90, %92 : vector<8x128xf32>
    %c0_75 = arith.constant 0 : index
    %c1_76 = arith.constant 1 : index
    %c0_77 = arith.constant 0 : index
    %c0_78 = arith.constant 0 : index
    %94 = vector.load %arg7[%c0_75, %c1_76, %c0_77, %c0_78] : memref<1x4x8x128xf32, #tpu.memory_space<vmem>>, vector<1x1x8x128xf32>
    %95 = vector.shape_cast %94 : vector<1x1x8x128xf32> to vector<8x128xf32>
    %96 = vector.shape_cast %93 : vector<8x128xf32> to vector<1x1x8x128xf32>
    tpu.vector_store %arg7[%c0_75, %c1_76, %c0_77, %c0_78], %96 {strides = array<i32>} : memref<1x4x8x128xf32, #tpu.memory_space<vmem>>, vector<1x1x8x128xf32>,
    %c0_79 = arith.constant 0 : index
    %c2_80 = arith.constant 2 : index
    %c0_81 = arith.constant 0 : index
    %c0_82 = arith.constant 0 : index
    %97 = vector.load %arg3[%c0_79, %c2_80, %c0_81, %c0_82] : memref<1x4x8x128xf32, #tpu.memory_space<vmem>>, vector<1x1x8x128xf32>
    %98 = vector.shape_cast %97 : vector<1x1x8x128xf32> to vector<8x128xf32>
    %99 = arith.subf %98, %19 : vector<8x128xf32>
    %100 = math.exp %99 : vector<8x128xf32>
    %101 = arith.mulf %100, %44 : vector<8x128xf32>
    %c2_83 = arith.constant 2 : index
    %102 = memref.load %arg2[%c2_83] : memref<4xf32, #tpu.memory_space<smem>>
    %103 = vector.broadcast %102 : f32 to vector<8x128xf32>
    %104 = arith.mulf %101, %103 : vector<8x128xf32>
    %c0_84 = arith.constant 0 : index
    %c2_85 = arith.constant 2 : index
    %c0_86 = arith.constant 0 : index
    %c0_87 = arith.constant 0 : index
    %105 = vector.load %arg6[%c0_84, %c2_85, %c0_86, %c0_87] : memref<1x4x8x128xf32, #tpu.memory_space<vmem>>, vector<1x1x8x128xf32>
    %106 = vector.shape_cast %105 : vector<1x1x8x128xf32> to vector<8x128xf32>
    %107 = vector.shape_cast %104 : vector<8x128xf32> to vector<1x1x8x128xf32>
    tpu.vector_store %arg6[%c0_84, %c2_85, %c0_86, %c0_87], %107 {strides = array<i32>} : memref<1x4x8x128xf32, #tpu.memory_space<vmem>>, vector<1x1x8x128xf32>,
    %c2_i32 = arith.constant 2 : i32
    %108 = vector.broadcast %c2_i32 : i32 to vector<8x128xi32>
    %109 = arith.cmpi eq, %4, %108 : vector<8x128xi32>
    %110 = arith.extui %109 : vector<8x128xi1> to vector<8x128xi32>
    %111 = arith.sitofp %110 : vector<8x128xi32> to vector<8x128xf32>
    %c0_88 = arith.constant 0 : index
    %c2_89 = arith.constant 2 : index
    %c0_90 = arith.constant 0 : index
    %c0_91 = arith.constant 0 : index
    %112 = vector.load %arg5[%c0_88, %c2_89, %c0_90, %c0_91] : memref<1x4x8x128xf32, #tpu.memory_space<vmem>>, vector<1x1x8x128xf32>
    %113 = vector.shape_cast %112 : vector<1x1x8x128xf32> to vector<8x128xf32>
    %114 = vector.shape_cast %111 : vector<8x128xf32> to vector<1x1x8x128xf32>
    tpu.vector_store %arg5[%c0_88, %c2_89, %c0_90, %c0_91], %114 {strides = array<i32>} : memref<1x4x8x128xf32, #tpu.memory_space<vmem>>, vector<1x1x8x128xf32>,
    %c0_92 = arith.constant 0 : index
    %c2_93 = arith.constant 2 : index
    %c0_94 = arith.constant 0 : index
    %c0_95 = arith.constant 0 : index
    %115 = vector.load %arg7[%c0_92, %c2_93, %c0_94, %c0_95] : memref<1x4x8x128xf32, #tpu.memory_space<vmem>>, vector<1x1x8x128xf32>
    %116 = vector.shape_cast %115 : vector<1x1x8x128xf32> to vector<8x128xf32>
    %117 = vector.shape_cast %104 : vector<8x128xf32> to vector<1x8x128xf32>
    %cst_96 = arith.constant dense<0.000000e+00> : vector<8x128xf32>
    %118 = vector.multi_reduction <add>, %117, %cst_96 [0] : vector<1x8x128xf32> to vector<8x128xf32>
    %119 = arith.addf %116, %118 : vector<8x128xf32>
    %c0_97 = arith.constant 0 : index
    %c2_98 = arith.constant 2 : index
    %c0_99 = arith.constant 0 : index
    %c0_100 = arith.constant 0 : index
    %120 = vector.load %arg7[%c0_97, %c2_98, %c0_99, %c0_100] : memref<1x4x8x128xf32, #tpu.memory_space<vmem>>, vector<1x1x8x128xf32>
    %121 = vector.shape_cast %120 : vector<1x1x8x128xf32> to vector<8x128xf32>
    %122 = vector.shape_cast %119 : vector<8x128xf32> to vector<1x1x8x128xf32>
    tpu.vector_store %arg7[%c0_97, %c2_98, %c0_99, %c0_100], %122 {strides = array<i32>} : memref<1x4x8x128xf32, #tpu.memory_space<vmem>>, vector<1x1x8x128xf32>,
    %c0_101 = arith.constant 0 : index
    %c3_102 = arith.constant 3 : index
    %c0_103 = arith.constant 0 : index
    %c0_104 = arith.constant 0 : index
    %123 = vector.load %arg3[%c0_101, %c3_102, %c0_103, %c0_104] : memref<1x4x8x128xf32, #tpu.memory_space<vmem>>, vector<1x1x8x128xf32>
    %124 = vector.shape_cast %123 : vector<1x1x8x128xf32> to vector<8x128xf32>
    %125 = arith.subf %124, %19 : vector<8x128xf32>
    %126 = math.exp %125 : vector<8x128xf32>
    %127 = arith.mulf %126, %44 : vector<8x128xf32>
    %c3_105 = arith.constant 3 : index
    %128 = memref.load %arg2[%c3_105] : memref<4xf32, #tpu.memory_space<smem>>
    %129 = vector.broadcast %128 : f32 to vector<8x128xf32>
    %130 = arith.mulf %127, %129 : vector<8x128xf32>
    %c0_106 = arith.constant 0 : index
    %c3_107 = arith.constant 3 : index
    %c0_108 = arith.constant 0 : index
    %c0_109 = arith.constant 0 : index
    %131 = vector.load %arg6[%c0_106, %c3_107, %c0_108, %c0_109] : memref<1x4x8x128xf32, #tpu.memory_space<vmem>>, vector<1x1x8x128xf32>
    %132 = vector.shape_cast %131 : vector<1x1x8x128xf32> to vector<8x128xf32>
    %133 = vector.shape_cast %130 : vector<8x128xf32> to vector<1x1x8x128xf32>
    tpu.vector_store %arg6[%c0_106, %c3_107, %c0_108, %c0_109], %133 {strides = array<i32>} : memref<1x4x8x128xf32, #tpu.memory_space<vmem>>, vector<1x1x8x128xf32>,
    %c3_i32 = arith.constant 3 : i32
    %134 = vector.broadcast %c3_i32 : i32 to vector<8x128xi32>
    %135 = arith.cmpi eq, %4, %134 : vector<8x128xi32>
    %136 = arith.extui %135 : vector<8x128xi1> to vector<8x128xi32>
    %137 = arith.sitofp %136 : vector<8x128xi32> to vector<8x128xf32>
    %c0_110 = arith.constant 0 : index
    %c3_111 = arith.constant 3 : index
    %c0_112 = arith.constant 0 : index
    %c0_113 = arith.constant 0 : index
    %138 = vector.load %arg5[%c0_110, %c3_111, %c0_112, %c0_113] : memref<1x4x8x128xf32, #tpu.memory_space<vmem>>, vector<1x1x8x128xf32>
    %139 = vector.shape_cast %138 : vector<1x1x8x128xf32> to vector<8x128xf32>
    %140 = vector.shape_cast %137 : vector<8x128xf32> to vector<1x1x8x128xf32>
    tpu.vector_store %arg5[%c0_110, %c3_111, %c0_112, %c0_113], %140 {strides = array<i32>} : memref<1x4x8x128xf32, #tpu.memory_space<vmem>>, vector<1x1x8x128xf32>,
    %c0_114 = arith.constant 0 : index
    %c3_115 = arith.constant 3 : index
    %c0_116 = arith.constant 0 : index
    %c0_117 = arith.constant 0 : index
    %141 = vector.load %arg7[%c0_114, %c3_115, %c0_116, %c0_117] : memref<1x4x8x128xf32, #tpu.memory_space<vmem>>, vector<1x1x8x128xf32>
    %142 = vector.shape_cast %141 : vector<1x1x8x128xf32> to vector<8x128xf32>
    %143 = vector.shape_cast %130 : vector<8x128xf32> to vector<1x8x128xf32>
    %cst_118 = arith.constant dense<0.000000e+00> : vector<8x128xf32>
    %144 = vector.multi_reduction <add>, %143, %cst_118 [0] : vector<1x8x128xf32> to vector<8x128xf32>
    %145 = arith.addf %142, %144 : vector<8x128xf32>
    %c0_119 = arith.constant 0 : index
    %c3_120 = arith.constant 3 : index
    %c0_121 = arith.constant 0 : index
    %c0_122 = arith.constant 0 : index
    %146 = vector.load %arg7[%c0_119, %c3_120, %c0_121, %c0_122] : memref<1x4x8x128xf32, #tpu.memory_space<vmem>>, vector<1x1x8x128xf32>
    %147 = vector.shape_cast %146 : vector<1x1x8x128xf32> to vector<8x128xf32>
    %148 = vector.shape_cast %145 : vector<8x128xf32> to vector<1x1x8x128xf32>
    tpu.vector_store %arg7[%c0_119, %c3_120, %c0_121, %c0_122], %148 {strides = array<i32>} : memref<1x4x8x128xf32, #tpu.memory_space<vmem>>, vector<1x1x8x128xf32>,
    return
  }
  func.func @transform_0(%arg0: i32, %arg1: i32) -> i32 {
    %c0_i32 = arith.constant 0 : i32
    %c0_i32_0 = arith.constant 0 : i32
    return %c0_i32 : i32
  }
  func.func @transform_1(%arg0: i32, %arg1: i32) -> (i32, i32, i32, i32) {
    %c0_i32 = arith.constant 0 : i32
    %c0_i32_0 = arith.constant 0 : i32
    %c0_i32_1 = arith.constant 0 : i32
    return %arg0, %c0_i32, %arg1, %c0_i32_0 : i32, i32, i32, i32
  }
  func.func @transform_2(%arg0: i32, %arg1: i32) -> (i32, i32, i32, i32) {
    %c0_i32 = arith.constant 0 : i32
    %c0_i32_0 = arith.constant 0 : i32
    %c0_i32_1 = arith.constant 0 : i32
    return %arg0, %c0_i32, %arg1, %c0_i32_0 : i32, i32, i32, i32
  }
  func.func @transform_3(%arg0: i32, %arg1: i32) -> (i32, i32, i32, i32) {
    %c0_i32 = arith.constant 0 : i32
    %c0_i32_0 = arith.constant 0 : i32
    %c0_i32_1 = arith.constant 0 : i32
    return %arg0, %c0_i32, %arg1, %c0_i32_0 : i32, i32, i32, i32
  }
  func.func @transform_4(%arg0: i32, %arg1: i32) -> (i32, i32, i32, i32) {
    %c0_i32 = arith.constant 0 : i32
    %c0_i32_0 = arith.constant 0 : i32
    %c0_i32_1 = arith.constant 0 : i32
    return %arg0, %c0_i32, %arg1, %c0_i32_0 : i32, i32, i32, i32
  }
  func.func @transform_5(%arg0: i32, %arg1: i32) -> (i32, i32, i32, i32) {
    %c0_i32 = arith.constant 0 : i32
    %c0_i32_0 = arith.constant 0 : i32
    %c0_i32_1 = arith.constant 0 : i32
    %c0_i32_2 = arith.constant 0 : i32
    return %arg0, %c0_i32, %c0_i32_0, %c0_i32_1 : i32, i32, i32, i32
  }
}

</mosaic_0001>

<llo_original>
// kernel: tpu_custom_call.1
$region0: #{tpu_custom_call.1}
  #allocation0 [shape = 'u32[]', space=smem, size = 0x4, offset = 0x4, fixed_abs, tag = 'smem constant byte address 0x4 - core index']
  #allocation1 [shape = 'u32[72,128]{1,0:T(1,128)}', space=vmem, size = 0x9000, scoped, tag = 'internal scratch']
  %s0 = inlined_call_operand.hbm [shape: f32[4], index: 0, kind: input, shape index: {}]
  %s1 = inlined_call_operand.hbm [shape: f32[2,4,8,128], index: 1, kind: input, shape index: {}]
  %s2 = inlined_call_operand.hbm [shape: s32[2,1,8,128], index: 2, kind: input, shape index: {}]
  %s3 = inlined_call_operand.hbm [shape: f32[2,4,8,128], index: 3, kind: output, shape index: {0}]
  %s4 = inlined_call_operand.hbm [shape: f32[2,4,8,128], index: 4, kind: output, shape index: {1}]
  %s5 = inlined_call_operand.hbm [shape: f32[2,4,8,128], index: 5, kind: output, shape index: {2}]
  %6 = xla_tuple %s3, %s4, %s5
  %s7 = sld [smem:[#allocation0]]
  $region77: #{tpu_custom_call.1} parent=0
    _
  %s9 = ssub.s32 1, %s7
  %s10 = scalar_select 0, %s9, %s7
  $region1: #{tpu_custom_call.1} parent=0
    #allocation2 [shape = 'u8[512]{0}', space=smem, size = 0x200, scoped, tag = 'input window, operand 0, single buffered']
    #allocation3 [shape = 's32[2]{0}', space=sflag, size = 0x8, scoped, tag = 'scoped memory for tpu_custom_call.1']
    #allocation4 [shape = 's32[2]{0}', space=sflag, size = 0x8, scoped, tag = 'scoped memory for tpu_custom_call.1']
    #allocation5 [shape = 's32[2]{0}', space=sflag, size = 0x8, scoped, tag = 'scoped memory for tpu_custom_call.1']
    #allocation6 [shape = 'u8[32768]{0}', space=vmem, size = 0x8000, scoped, tag = 'input window, operand 1']
    #allocation7 [shape = 'u8[8192]{0}', space=vmem, size = 0x2000, scoped, tag = 'input window, operand 2']
    #allocation8 [shape = 's32[2]{0}', space=sflag, size = 0x8, scoped, tag = 'scoped memory for tpu_custom_call.1']
    #allocation9 [shape = 'u8[32768]{0}', space=vmem, size = 0x8000, scoped, tag = 'output window, operand 0']
    #allocation10 [shape = 'u8[32768]{0}', space=vmem, size = 0x8000, scoped, tag = 'output window, operand 1']
    #allocation11 [shape = 's32[2]{0}', space=sflag, size = 0x8, scoped, tag = 'scoped memory for tpu_custom_call.1']
    #allocation12 [shape = 'u8[32768]{0}', space=vmem, size = 0x8000, scoped, tag = 'output window, operand 2']
    %11 = vsyncpa [#allocation5], 0
    %12 = vsyncpa [#allocation3], 0
    %s13 = scalar_lea.sflag [#allocation3], 1
    %14 = vsyncpa %s13, 0
    %15 = vsyncpa [#allocation8], 0
    %s16 = scalar_lea.sflag [#allocation8], 1
    %17 = vsyncpa %s16, 0
    %18 = vsyncpa [#allocation4], 0
    %s19 = scalar_lea.sflag [#allocation4], 1
    %20 = vsyncpa %s19, 0
    %21 = vsyncpa [#allocation11], 0
    %s22 = scalar_lea.sflag [#allocation11], 1
    %23 = vsyncpa %s22, 0
    loop: start=0, step=1, limit=4
    $region2: #{tpu_custom_call.1} parent=1 // loop_pre_header
      _
    $region3: #{tpu_custom_call.1} parent=1 // loop_header
      %s25 = sphi 0, %s29
      %p26 = scmp.ge.s32.totalorder %s25, 4
      %s32 = sphi 0, %s44
      %s33 = sphi 0, %s40
      %s34 = sphi 0, %s32
      %s35 = sphi 0, %s33
      %s36 = sphi 0, %s34
      %s37 = sphi 0, %s35
      %s45 = sphi 0, %s45
      %s47 = sphi 0, %s45
      %s48 = sphi 0, %s47
      %s62 = sphi 0, %s48
      %s70 = sphi 0, %s72
      %s73 = sphi 0, %s70
      %s74 = sphi 0, %s73
      %s90 = sphi 0, %s74
      %s98 = sphi 0, %s100
      %s101 = sphi 0, %s98
      %s102 = sphi 0, %s101
      %s118 = sphi 0, %s102
      %s126 = sphi 0, %s128
      %s129 = sphi 0, %s126
      %s130 = sphi 0, %s129
      %s146 = sphi 0, %s130
      %s154 = sphi 0, %s156
      %s157 = sphi 0, %s154
      %s158 = sphi 0, %s157
      %s174 = sphi 0, %s158
      %s180 = sphi 0, %s182
      %s183 = sphi 0, %s180
      %s184 = sphi 0, %s183
      %s200 = sphi 0, %s184
    $region4: #{tpu_custom_call.1} parent=1 // loop_header_branch
      %28 = sbr.rel (%p26) target = $region8
    $region5: #{tpu_custom_call.1} parent=1 // loop_body
      %s30 = ssub.s32 %s25, 1
      %s31 = ssub.s32 %s25, 2
      %s38 = sadd.s32 1, %s33
      %p39 = scmp.ge.s32.totalorder %s38, 1
      %s40 = scalar_select %p39, 0, %s38
      %s41 = sadd.s32 1, %s32
      %s42 = scalar_select %p39, %s41, %s32
      %p43 = scmp.ge.s32.totalorder %s42, 2
      %s44 = scalar_select %p43, 0, %s42
      %s46 = sadd.s32 %s45, 1
      %p49 = scmp.eq.s32.totalorder %s25, 1
      %p50 = scmp.ne.s32.totalorder %s45, %s47
      %p51 = scmp.eq.s32.totalorder %s25, 0
      %p52 = por %p50, %p51
      %p53 = scmp.ne.s32.totalorder %s45, %s47
      %p54 = scmp.eq.s32.totalorder %s30, 1
      %p55 = por %p53, %p54
      %p56 = scmp.ne.s32.totalorder %s47, %s48
      %p57 = scmp.eq.s32.totalorder %s30, 0
      %p58 = por %p56, %p57
      %p59 = scmp.ne.s32.totalorder %s47, %s48
      %p60 = scmp.eq.s32.totalorder %s31, 1
      %p61 = por %p59, %p60
      %p63 = scmp.ne.s32.totalorder %s48, %s62
      %p64 = scmp.eq.s32.totalorder %s31, 0
      %p65 = por %p63, %p64
      %s66 = ssub.s32 %s32, %s44
      %s67 = ssub.s32 %s33, %s40
      %s68 = sor.u32 %s66, %s67
      %p69 = scmp.eq.s32.totalorder %s68, 0
      %s71 = sadd.s32 %s70, 1
      %s72 = scalar_select %p69, %s70, %s71
      %p75 = pneg %p69
      %p76 = scmp.eq.s32.totalorder %s25, 1
      %p77 = por %p75, %p76
      %p78 = scmp.ne.s32.totalorder %s70, %s73
      %p79 = scmp.eq.s32.totalorder %s25, 0
      %p80 = por %p78, %p79
      %p81 = scmp.ne.s32.totalorder %s70, %s73
      %p82 = scmp.eq.s32.totalorder %s30, 1
      %p83 = por %p81, %p82
      %p84 = scmp.ne.s32.totalorder %s73, %s74
      %p85 = scmp.eq.s32.totalorder %s30, 0
      %p86 = por %p84, %p85
      %p87 = scmp.ne.s32.totalorder %s73, %s74
      %p88 = scmp.eq.s32.totalorder %s31, 1
      %p89 = por %p87, %p88
      %p91 = scmp.ne.s32.totalorder %s74, %s90
      %p92 = scmp.eq.s32.totalorder %s31, 0
      %p93 = por %p91, %p92
      %s94 = ssub.s32 %s32, %s44
      %s95 = ssub.s32 %s33, %s40
      %s96 = sor.u32 %s94, %s95
      %p97 = scmp.eq.s32.totalorder %s96, 0
      %s99 = sadd.s32 %s98, 1
      %s100 = scalar_select %p97, %s98, %s99
      %p103 = pneg %p97
      %p104 = scmp.eq.s32.totalorder %s25, 1
      %p105 = por %p103, %p104
      %p106 = scmp.ne.s32.totalorder %s98, %s101
      %p107 = scmp.eq.s32.totalorder %s25, 0
      %p108 = por %p106, %p107
      %p109 = scmp.ne.s32.totalorder %s98, %s101
      %p110 = scmp.eq.s32.totalorder %s30, 1
      %p111 = por %p109, %p110
      %p112 = scmp.ne.s32.totalorder %s101, %s102
      %p113 = scmp.eq.s32.totalorder %s30, 0
      %p114 = por %p112, %p113
      %p115 = scmp.ne.s32.totalorder %s101, %s102
      %p116 = scmp.eq.s32.totalorder %s31, 1
      %p117 = por %p115, %p116
      %p119 = scmp.ne.s32.totalorder %s102, %s118
      %p120 = scmp.eq.s32.totalorder %s31, 0
      %p121 = por %p119, %p120
      %s122 = ssub.s32 %s32, %s44
      %s123 = ssub.s32 %s33, %s40
      %s124 = sor.u32 %s122, %s123
      %p125 = scmp.eq.s32.totalorder %s124, 0
      %s127 = sadd.s32 %s126, 1
      %s128 = scalar_select %p125, %s126, %s127
      %p131 = pneg %p125
      %p132 = scmp.eq.s32.totalorder %s25, 1
      %p133 = por %p131, %p132
      %p134 = scmp.ne.s32.totalorder %s126, %s129
      %p135 = scmp.eq.s32.totalorder %s25, 0
      %p136 = por %p134, %p135
      %p137 = scmp.ne.s32.totalorder %s126, %s129
      %p138 = scmp.eq.s32.totalorder %s30, 1
      %p139 = por %p137, %p138
      %p140 = scmp.ne.s32.totalorder %s129, %s130
      %p141 = scmp.eq.s32.totalorder %s30, 0
      %p142 = por %p140, %p141
      %p143 = scmp.ne.s32.totalorder %s129, %s130
      %p144 = scmp.eq.s32.totalorder %s31, 1
      %p145 = por %p143, %p144
      %p147 = scmp.ne.s32.totalorder %s130, %s146
      %p148 = scmp.eq.s32.totalorder %s31, 0
      %p149 = por %p147, %p148
      %s150 = ssub.s32 %s32, %s44
      %s151 = ssub.s32 %s33, %s40
      %s152 = sor.u32 %s150, %s151
      %p153 = scmp.eq.s32.totalorder %s152, 0
      %s155 = sadd.s32 %s154, 1
      %s156 = scalar_select %p153, %s154, %s155
      %p159 = pneg %p153
      %p160 = scmp.eq.s32.totalorder %s25, 1
      %p161 = por %p159, %p160
      %p162 = scmp.ne.s32.totalorder %s154, %s157
      %p163 = scmp.eq.s32.totalorder %s25, 0
      %p164 = por %p162, %p163
      %p165 = scmp.ne.s32.totalorder %s154, %s157
      %p166 = scmp.eq.s32.totalorder %s30, 1
      %p167 = por %p165, %p166
      %p168 = scmp.ne.s32.totalorder %s157, %s158
      %p169 = scmp.eq.s32.totalorder %s30, 0
      %p170 = por %p168, %p169
      %p171 = scmp.ne.s32.totalorder %s157, %s158
      %p172 = scmp.eq.s32.totalorder %s31, 1
      %p173 = por %p171, %p172
      %p175 = scmp.ne.s32.totalorder %s158, %s174
      %p176 = scmp.eq.s32.totalorder %s31, 0
      %p177 = por %p175, %p176
      %s178 = ssub.s32 %s32, %s44
      %p179 = scmp.eq.s32.totalorder %s178, 0
      %s181 = sadd.s32 %s180, 1
      %s182 = scalar_select %p179, %s180, %s181
      %p185 = pneg %p179
      %p186 = scmp.eq.s32.totalorder %s25, 1
      %p187 = por %p185, %p186
      %p188 = scmp.ne.s32.totalorder %s180, %s183
      %p189 = scmp.eq.s32.totalorder %s25, 0
      %p190 = por %p188, %p189
      %p191 = scmp.ne.s32.totalorder %s180, %s183
      %p192 = scmp.eq.s32.totalorder %s30, 1
      %p193 = por %p191, %p192
      %p194 = scmp.ne.s32.totalorder %s183, %s184
      %p195 = scmp.eq.s32.totalorder %s30, 0
      %p196 = por %p194, %p195
      %p197 = scmp.ne.s32.totalorder %s183, %s184
      %p198 = scmp.eq.s32.totalorder %s31, 1
      %p199 = por %p197, %p198
      %p201 = scmp.ne.s32.totalorder %s184, %s200
      %p202 = scmp.eq.s32.totalorder %s31, 0
      %p203 = por %p201, %p202
      %p204 = scmp.le.s32.totalorder 1, %s25
      %p205 = scmp.lt.s32.totalorder %s25, 3
      %p206 = pnand %p204, %p205
      %p207 = pneg %p206
      // Predicated region
      $region9: #{tpu_custom_call.1} parent=5 // pred_check
        _
      $region10: #{tpu_custom_call.1} parent=5 // pred_check_branch
        %209 = sbr.rel (%p206) target = $region12
      $region11: #{tpu_custom_call.1} parent=5 // pred_region
        %s210 = ssub.s32 %s25, 1
        // Predicated region
        $region13: #{tpu_custom_call.1} parent=11 // pred_check
          %p211 = pneg %p58
        $region14: #{tpu_custom_call.1} parent=11 // pred_check_branch
          %213 = sbr.rel (%p211) target = $region16
        $region15: #{tpu_custom_call.1} parent=11 // pred_region
          %215 = vsyncadd [#allocation5], 0
          %s217 = sshll.u32 %s0, 4
          %s218 = int_to_ptr.hbm [resolvable:$true] %s217
          %220 = dma.hbm_to_smem %s218, 16, [#allocation2], [#allocation5]
        $region16: #{tpu_custom_call.1} parent=11 // pred_fallthru
          _
      $region12: #{tpu_custom_call.1} parent=5 // pred_fallthru
        _
      %p221 = scmp.lt.s32.totalorder %s25, 2
      // Predicated region
      $region17: #{tpu_custom_call.1} parent=5 // pred_check
        %p222 = pneg %p221
      $region18: #{tpu_custom_call.1} parent=5 // pred_check_branch
        %224 = sbr.rel (%p222) target = $region20
      $region19: #{tpu_custom_call.1} parent=5 // pred_region
        // Predicated region
        $region21: #{tpu_custom_call.1} parent=19 // pred_check
          %p225 = pneg %p80
        $region22: #{tpu_custom_call.1} parent=19 // pred_check_branch
          %227 = sbr.rel (%p225) target = $region24
        $region23: #{tpu_custom_call.1} parent=19 // pred_region
          %s228 = sand.u32 %s70, 1
          %s229 = scalar_lea.sflag [#allocation3], %s228
          %s230 = sand.u32 %s70, 1
          %s231 = smul.addr %s230, 32
          %s232 = scalar_lea.vmem [#allocation6], %s231
          %234 = vsyncadd %s229, 0
          %s235 = smul.addr %s32, 4
          %s236 = sadd.s32 %s33, %s235
          %s237 = smul.addr %s236, 8
          %s238 = scalar_lea.hbm %s1, %s237
          %s239 = sshll.u32 %s238, 4
          %s240 = int_to_ptr.hbm [resolvable:$true] %s239
          %s241 = sshll.u32 %s232, 4
          %s242 = int_to_ptr.vmem [resolvable:$true] %s241
          %247 = dma.hbm_to_vmem [thread:$0]  %s240, 512, %s242, %s229, 128, 128, 8
        $region24: #{tpu_custom_call.1} parent=19 // pred_fallthru
          _
        // Predicated region
        $region25: #{tpu_custom_call.1} parent=19 // pred_check
          %p248 = pneg %p108
        $region26: #{tpu_custom_call.1} parent=19 // pred_check_branch
          %250 = sbr.rel (%p248) target = $region28
        $region27: #{tpu_custom_call.1} parent=19 // pred_region
          %s251 = sand.u32 %s98, 1
          %s252 = scalar_lea.sflag [#allocation8], %s251
          %s253 = sand.u32 %s98, 1
          %s254 = smul.addr %s253, 8
          %s255 = scalar_lea.vmem [#allocation7], %s254
          %257 = vsyncadd %s252, 0
          %s258 = sadd.s32 %s33, %s32
          %s259 = smul.addr %s258, 8
          %s260 = scalar_lea.hbm %s2, %s259
          %s262 = sshll.u32 %s260, 4
          %s263 = int_to_ptr.hbm [resolvable:$true] %s262
          %s264 = sshll.u32 %s255, 4
          %s265 = int_to_ptr.vmem [resolvable:$true] %s264
          %267 = dma.hbm_to_vmem [thread:$0]  %s263, 128, %s265, %s252
        $region28: #{tpu_custom_call.1} parent=19 // pred_fallthru
          _
      $region20: #{tpu_custom_call.1} parent=5 // pred_fallthru
        _
      %p268 = scmp.le.s32.totalorder 1, %s25
      %p269 = scmp.lt.s32.totalorder %s25, 3
      %p270 = pnand %p268, %p269
      %p271 = pneg %p270
      // Predicated region
      $region29: #{tpu_custom_call.1} parent=5 // pred_check
        _
      $region30: #{tpu_custom_call.1} parent=5 // pred_check_branch
        %273 = sbr.rel (%p270) target = $region32
      $region31: #{tpu_custom_call.1} parent=5 // pred_region
        %s274 = ssub.s32 %s25, 1
        // Predicated region
        $region33: #{tpu_custom_call.1} parent=31 // pred_check
          %p275 = pneg %p58
        $region34: #{tpu_custom_call.1} parent=31 // pred_check_branch
          %277 = sbr.rel (%p275) target = $region36
        $region35: #{tpu_custom_call.1} parent=31 // pred_region
          %279 = dma.done [#allocation5], 16
        $region36: #{tpu_custom_call.1} parent=31 // pred_fallthru
          _
        %s280 = sand.u32 %s73, 1
        %s281 = scalar_lea.sflag [#allocation3], %s280
        %s282 = sand.u32 %s73, 1
        %s283 = smul.addr %s282, 32
        %s284 = scalar_lea.vmem [#allocation6], %s283
        // Predicated region
        $region37: #{tpu_custom_call.1} parent=31 // pred_check
          %p285 = pneg %p86
        $region38: #{tpu_custom_call.1} parent=31 // pred_check_branch
          %287 = sbr.rel (%p285) target = $region40
        $region39: #{tpu_custom_call.1} parent=31 // pred_region
          %289 = dma.done %s281, 512
        $region40: #{tpu_custom_call.1} parent=31 // pred_fallthru
          _
        %s290 = sand.u32 %s101, 1
        %s291 = scalar_lea.sflag [#allocation8], %s290
        %s292 = sand.u32 %s101, 1
        %s293 = smul.addr %s292, 8
        %s294 = scalar_lea.vmem [#allocation7], %s293
        // Predicated region
        $region41: #{tpu_custom_call.1} parent=31 // pred_check
          %p295 = pneg %p114
        $region42: #{tpu_custom_call.1} parent=31 // pred_check_branch
          %297 = sbr.rel (%p295) target = $region44
        $region43: #{tpu_custom_call.1} parent=31 // pred_region
          %299 = dma.done %s291, 128
        $region44: #{tpu_custom_call.1} parent=31 // pred_fallthru
          _
        %300 = sfence
        %p301 = pneg %p58
        %p302 = pneg %p55
        %s303 = sand.u32 %s73, 1
        %s304 = scalar_lea.sflag [#allocation3], %s303
        %s305 = sand.u32 %s73, 1
        %s306 = smul.addr %s305, 32
        %s307 = scalar_lea.vmem [#allocation6], %s306
        %p308 = pneg %p86
        %p309 = pneg %p83
        %s310 = sand.u32 %s101, 1
        %s311 = scalar_lea.sflag [#allocation8], %s310
        %s312 = sand.u32 %s101, 1
        %s313 = smul.addr %s312, 8
        %s314 = scalar_lea.vmem [#allocation7], %s313
        %p315 = pneg %p114
        %p316 = pneg %p111
        %p317 = pneg %p142
        %p318 = pneg %p139
        %s319 = sand.u32 %s129, 1
        %s320 = scalar_lea.sflag [#allocation4], %s319
        %s321 = sand.u32 %s129, 1
        %s322 = smul.addr %s321, 32
        %s323 = scalar_lea.vmem [#allocation9], %s322
        %p324 = pneg %p170
        %p325 = pneg %p167
        %s326 = sand.u32 %s30, 1
        %s327 = scalar_lea.sflag [#allocation11], %s326
        %s328 = sand.u32 %s157, 1
        %s329 = smul.addr %s328, 32
        %s330 = scalar_lea.vmem [#allocation10], %s329
        %p331 = pneg %p196
        %p332 = pneg %p193
        %s333 = sand.u32 %s30, 1
        %s334 = scalar_lea.sflag [#allocation11], %s333
        %s335 = sand.u32 %s183, 1
        %s336 = smul.addr %s335, 32
        %s337 = scalar_lea.vmem [#allocation12], %s336
        %p338 = scmp.eq.s32.totalorder %s35, 0
        // Predicated region
        $region45: #{tpu_custom_call.1} parent=31 // pred_check
          %p339 = pneg %p338
        $region46: #{tpu_custom_call.1} parent=31 // pred_check_branch
          %341 = sbr.rel (%p339) target = $region48
        $region47: #{tpu_custom_call.1} parent=31 // pred_region
          %342 = vst [vmem:[%s337] sm:$0xff] 0.0
          %343 = vst [vmem:[%s337 + $0x8] sm:$0xff] 0.0
          %344 = vst [vmem:[%s337 + $0x10] sm:$0xff] 0.0
          %345 = vst [vmem:[%s337 + $0x18] sm:$0xff] 0.0
        $region48: #{tpu_custom_call.1} parent=31 // pred_fallthru
          _
        %v346 = vld [vmem:[%s294] sm:$0xff]
        %vm347 = vcmp.ge.s32.totalorder %v346, 0
        %v348 = vsel %vm347, 1, 0
        %v349 = vcvt.s32.f32 %v348
        %v350 = vld [vmem:[%s284] sm:$0xff]
        %s351 = scalar_lea.vmem %s284, 8 [#allocation6]
        %v352 = vld [vmem:[%s351] sm:$0xff]
        %v353 = vmax.f32 %v350, %v352
        %s354 = scalar_lea.vmem %s284, 16 [#allocation6]
        %v355 = vld [vmem:[%s354] sm:$0xff]
        %v356 = vmax.f32 %v353, %v355
        %s357 = scalar_lea.vmem %s284, 24 [#allocation6]
        %v358 = vld [vmem:[%s357] sm:$0xff]
        %v359 = vmax.f32 %v356, %v358
        %v360 = vsub.f32 %v350, %v359
        %v361 = vmul.f32 %v360, 1.442695
        %v362 = vpow.pop %v361
        %v363 = vsub.f32 %v352, %v359
        %v364 = vmul.f32 %v363, 1.442695
        %v365 = vpow.pop %v364
        %v366 = vadd.f32 %v362, %v365
        %v367 = vsub.f32 %v355, %v359
        %v368 = vmul.f32 %v367, 1.442695
        %v369 = vpow.pop %v368
        %v370 = vadd.f32 %v366, %v369
        %v371 = vsub.f32 %v358, %v359
        %v372 = vmul.f32 %v371, 1.442695
        %v373 = vpow.pop %v372
        %v374 = vadd.f32 %v370, %v373
        %v375 = vrcp.pop %v374
        %v376 = vmul.f32 %v374, %v375
        %v377 = vsub.f32 2.0, %v376
        %v378 = vmul.f32 %v375, %v377
        %v379 = vmul.f32 %v378, %v349
        %v380 = vmul.f32 %v362, %v379
        %s381 = sld [smem:[#allocation2]]
        %v382 = vstv %s381
        %v383 = vmul.f32 %v380, %v382
        %384 = vst [vmem:[%s330] sm:$0xff] %v383
        %vm385 = vcmp.eq.s32.totalorder %v346, 0
        %v386 = vsel %vm385, 1, 0
        %v387 = vcvt.s32.f32 %v386
        %388 = vst [vmem:[%s323] sm:$0xff] %v387
        %v389 = vld [vmem:[%s337] sm:$0xff]
        %v390 = vadd.f32 %v383, 0.0
        %v391 = vadd.f32 %v389, %v390
        %392 = vst [vmem:[%s337] sm:$0xff] %v391
        %v393 = vld [vmem:[%s351] sm:$0xff]
        %v394 = vsub.f32 %v393, %v359
        %v395 = vmul.f32 %v394, 1.442695
        %v396 = vpow.pop %v395
        %v397 = vmul.f32 %v396, %v379
        %s398 = sld [smem:[#allocation2 + $0x1]]
        %v399 = vstv %s398
        %v400 = vmul.f32 %v397, %v399
        %s401 = scalar_lea.vmem %s330, 8 [#allocation10]
        %402 = vst [vmem:[%s401] sm:$0xff] %v400
        %vm403 = vcmp.eq.s32.totalorder %v346, 1
        %v404 = vsel %vm403, 1, 0
        %v405 = vcvt.s32.f32 %v404
        %s406 = scalar_lea.vmem %s323, 8 [#allocation9]
        %407 = vst [vmem:[%s406] sm:$0xff] %v405
        %s408 = scalar_lea.vmem %s337, 8 [#allocation12]
        %v409 = vld [vmem:[%s408] sm:$0xff]
        %v410 = vadd.f32 %v400, 0.0
        %v411 = vadd.f32 %v409, %v410
        %412 = vst [vmem:[%s408] sm:$0xff] %v411
        %v413 = vld [vmem:[%s354] sm:$0xff]
        %v414 = vsub.f32 %v413, %v359
        %v415 = vmul.f32 %v414, 1.442695
        %v416 = vpow.pop %v415
        %v417 = vmul.f32 %v416, %v379
        %s418 = sld [smem:[#allocation2 + $0x2]]
        %v419 = vstv %s418
        %v420 = vmul.f32 %v417, %v419
        %s421 = scalar_lea.vmem %s330, 16 [#allocation10]
        %422 = vst [vmem:[%s421] sm:$0xff] %v420
        %vm423 = vcmp.eq.s32.totalorder %v346, 2
        %v424 = vsel %vm423, 1, 0
        %v425 = vcvt.s32.f32 %v424
        %s426 = scalar_lea.vmem %s323, 16 [#allocation9]
        %427 = vst [vmem:[%s426] sm:$0xff] %v425
        %s428 = scalar_lea.vmem %s337, 16 [#allocation12]
        %v429 = vld [vmem:[%s428] sm:$0xff]
        %v430 = vadd.f32 %v420, 0.0
        %v431 = vadd.f32 %v429, %v430
        %432 = vst [vmem:[%s428] sm:$0xff] %v431
        %v433 = vld [vmem:[%s357] sm:$0xff]
        %v434 = vsub.f32 %v433, %v359
        %v435 = vmul.f32 %v434, 1.442695
        %v436 = vpow.pop %v435
        %v437 = vmul.f32 %v436, %v379
        %s438 = sld [smem:[#allocation2 + $0x3]]
        %v439 = vstv %s438
        %v440 = vmul.f32 %v437, %v439
        %s441 = scalar_lea.vmem %s330, 24 [#allocation10]
        %442 = vst [vmem:[%s441] sm:$0xff] %v440
        %vm443 = vcmp.eq.s32.totalorder %v346, 3
        %v444 = vsel %vm443, 1, 0
        %v445 = vcvt.s32.f32 %v444
        %s446 = scalar_lea.vmem %s323, 24 [#allocation9]
        %447 = vst [vmem:[%s446] sm:$0xff] %v445
        %s448 = scalar_lea.vmem %s337, 24 [#allocation12]
        %v449 = vld [vmem:[%s448] sm:$0xff]
        %v450 = vadd.f32 %v440, 0.0
        %v451 = vadd.f32 %v449, %v450
        %452 = vst [vmem:[%s448] sm:$0xff] %v451
        %s453 = sand.u32 %s129, 1
        %s454 = scalar_lea.sflag [#allocation4], %s453
        %s455 = sand.u32 %s129, 1
        %s456 = smul.addr %s455, 32
        %s457 = scalar_lea.vmem [#allocation9], %s456
        %s458 = sand.u32 %s30, 1
        %s459 = scalar_lea.sflag [#allocation11], %s458
        %s460 = sand.u32 %s157, 1
        %s461 = smul.addr %s460, 32
        %s462 = scalar_lea.vmem [#allocation10], %s461
        %s463 = sand.u32 %s30, 1
        %s464 = scalar_lea.sflag [#allocation11], %s463
        %s465 = sand.u32 %s183, 1
        %s466 = smul.addr %s465, 32
        %s467 = scalar_lea.vmem [#allocation12], %s466
        // Predicated region
        $region49: #{tpu_custom_call.1} parent=31 // pred_check
          %p468 = pneg %p139
        $region50: #{tpu_custom_call.1} parent=31 // pred_check_branch
          %470 = sbr.rel (%p468) target = $region52
        $region51: #{tpu_custom_call.1} parent=31 // pred_region
          %472 = vsyncadd %s454, 0
          %s473 = smul.addr %s34, 4
          %s474 = sadd.s32 %s35, %s473
          %s475 = smul.addr %s474, 8
          %s476 = scalar_lea.hbm %s3, %s475
          %s477 = sshll.u32 %s457, 4
          %s478 = int_to_ptr.vmem [resolvable:$true] %s477
          %s479 = sshll.u32 %s476, 4
          %s480 = int_to_ptr.hbm [resolvable:$true] %s479
          %485 = dma.vmem_to_hbm [thread:$0]  %s478, 512, %s480, %s454, 128, 128, 8
        $region52: #{tpu_custom_call.1} parent=31 // pred_fallthru
          _
        // Predicated region
        $region53: #{tpu_custom_call.1} parent=31 // pred_check
          %p486 = pneg %p167
        $region54: #{tpu_custom_call.1} parent=31 // pred_check_branch
          %488 = sbr.rel (%p486) target = $region56
        $region55: #{tpu_custom_call.1} parent=31 // pred_region
          %490 = vsyncadd %s459, 0
          %s491 = smul.addr %s34, 4
          %s492 = sadd.s32 %s35, %s491
          %s493 = smul.addr %s492, 8
          %s494 = scalar_lea.hbm %s4, %s493
          %s495 = sshll.u32 %s462, 4
          %s496 = int_to_ptr.vmem [resolvable:$true] %s495
          %s497 = sshll.u32 %s494, 4
          %s498 = int_to_ptr.hbm [resolvable:$true] %s497
          %503 = dma.vmem_to_hbm [thread:$0]  %s496, 512, %s498, %s459, 128, 128, 8
        $region56: #{tpu_custom_call.1} parent=31 // pred_fallthru
          _
        // Predicated region
        $region57: #{tpu_custom_call.1} parent=31 // pred_check
          %p504 = pneg %p193
        $region58: #{tpu_custom_call.1} parent=31 // pred_check_branch
          %506 = sbr.rel (%p504) target = $region60
        $region59: #{tpu_custom_call.1} parent=31 // pred_region
          %508 = vsyncadd %s464, 0
          %s509 = smul.addr %s34, 4
          %s510 = smul.addr %s509, 8
          %s511 = scalar_lea.hbm %s5, %s510
          %s512 = sshll.u32 %s467, 4
          %s513 = int_to_ptr.vmem [resolvable:$true] %s512
          %s514 = sshll.u32 %s511, 4
          %s515 = int_to_ptr.hbm [resolvable:$true] %s514
          %520 = dma.vmem_to_hbm [thread:$0]  %s513, 512, %s515, %s464, 128, 128, 8
        $region60: #{tpu_custom_call.1} parent=31 // pred_fallthru
          _
      $region32: #{tpu_custom_call.1} parent=5 // pred_fallthru
        _
      %p521 = scmp.le.s32.totalorder 2, %s25
      // Predicated region
      $region61: #{tpu_custom_call.1} parent=5 // pred_check
        %p522 = pneg %p521
      $region62: #{tpu_custom_call.1} parent=5 // pred_check_branch
        %524 = sbr.rel (%p522) target = $region64
      $region63: #{tpu_custom_call.1} parent=5 // pred_region
        %s525 = ssub.s32 %s25, 2
        // Predicated region
        $region65: #{tpu_custom_call.1} parent=63 // pred_check
          %p526 = pneg %p145
        $region66: #{tpu_custom_call.1} parent=63 // pred_check_branch
          %528 = sbr.rel (%p526) target = $region68
        $region67: #{tpu_custom_call.1} parent=63 // pred_region
          %s529 = sand.u32 %s130, 1
          %s530 = scalar_lea.sflag [#allocation4], %s529
          %s531 = sand.u32 %s130, 1
          %s532 = smul.addr %s531, 32
          %s533 = scalar_lea.vmem [#allocation9], %s532
          %535 = dma.done %s530, 512
        $region68: #{tpu_custom_call.1} parent=63 // pred_fallthru
          _
        // Predicated region
        $region69: #{tpu_custom_call.1} parent=63 // pred_check
          %p536 = pneg %p173
        $region70: #{tpu_custom_call.1} parent=63 // pred_check_branch
          %538 = sbr.rel (%p536) target = $region72
        $region71: #{tpu_custom_call.1} parent=63 // pred_region
          %s539 = sand.u32 %s31, 1
          %s540 = scalar_lea.sflag [#allocation11], %s539
          %s541 = sand.u32 %s158, 1
          %s542 = smul.addr %s541, 32
          %s543 = scalar_lea.vmem [#allocation10], %s542
          %545 = dma.done %s540, 512
        $region72: #{tpu_custom_call.1} parent=63 // pred_fallthru
          _
        // Predicated region
        $region73: #{tpu_custom_call.1} parent=63 // pred_check
          %p546 = pneg %p199
        $region74: #{tpu_custom_call.1} parent=63 // pred_check_branch
          %548 = sbr.rel (%p546) target = $region76
        $region75: #{tpu_custom_call.1} parent=63 // pred_region
          %s549 = sand.u32 %s31, 1
          %s550 = scalar_lea.sflag [#allocation11], %s549
          %s551 = sand.u32 %s184, 1
          %s552 = smul.addr %s551, 32
          %s553 = scalar_lea.vmem [#allocation12], %s552
          %555 = dma.done %s550, 512
        $region76: #{tpu_custom_call.1} parent=63 // pred_fallthru
          _
      $region64: #{tpu_custom_call.1} parent=5 // pred_fallthru
        _
    $region6: #{tpu_custom_call.1} parent=1 // loop_footer
      %s29 = sadd.s32 1, %s25
    $region7: #{tpu_custom_call.1} parent=1 // loop_footer_branch
      %24 = sbr.rel target = $region3
    $region8: #{tpu_custom_call.1} parent=1 // loop_exit
      _
    %556 = vsyncpa [#allocation3], 1
    %s557 = scalar_lea.sflag [#allocation3], 1
    %558 = vsyncpa %s557, 1
    %559 = vsyncpa [#allocation8], 1
    %s560 = scalar_lea.sflag [#allocation8], 1
    %561 = vsyncpa %s560, 1
    %562 = vsyncpa [#allocation4], 1
    %s563 = scalar_lea.sflag [#allocation4], 1
    %564 = vsyncpa %s563, 1
    %565 = vsyncpa [#allocation11], 1
    %s566 = scalar_lea.sflag [#allocation11], 1
    %567 = vsyncpa %s566, 1
    %568 = vsyncpa [#allocation5], 1
    %s569 = scalar_lea.sflag [#allocation5], 1
    %570 = vsyncpa %s569, 1

</llo_original>
